<compile_context>
chip_gen: v5e
topology: v5e:2x2
jax: 0.10.0
libtpu: 0.0.40
codegen_flags: <defaults>
</compile_context>

<pallas_src>
import jax
import jax.numpy as jnp
from jax.experimental import pallas as pl
from jax.experimental.pallas import tpu as pltpu

NUM_CLASSES = 17      # from loss(): F.one_hot(..., num_classes=17)
NUM_ACTIONESS = 2     # from loss(): F.one_hot(..., num_classes=2)
NUM_OUT = NUM_CLASSES + NUM_ACTIONESS   # 19 (merged head width)
OUT_PAD = 128                           # lane-dense padded output width
TK_MAX = 2048                           # max contraction tile (C*HW columns)


# --------------------------------------------------------------------------
# Hardware introspection (best effort; falls back to safe defaults).
# --------------------------------------------------------------------------
def _vmem_capacity_bytes():
    try:
        cap = int(getattr(pltpu.get_tpu_info(), "vmem_capacity_bytes", 0))
        if cap > 0:
            return cap
    except Exception:
        pass
    try:
        kind = jax.devices()[0].device_kind.lower()
        if "v7" in kind:
            return 64 * 1024 * 1024
    except Exception:
        pass
    return 128 * 1024 * 1024


def _num_tensorcores():
    try:
        dev = jax.devices()[0]
        nc = getattr(dev, "num_cores", None)
        if nc:
            return int(nc)
        kind = dev.device_kind.lower()
        if "v7" in kind or "v5p" in kind or "v4" in kind:
            return 2
    except Exception:
        pass
    return 1


# --------------------------------------------------------------------------
# Kernel: fused {spatial pool + segment consensus + fc_cls + fc_actioness}
# as one lane-dense MXU contraction, K-tiled with a resident f32 accumulator.
# --------------------------------------------------------------------------
def tsp_head_kernel(x_ref, w_ref, b_ref, out_ref, acc_ref):
    # x_ref:   (TB, S, TK)   activations (channels*spatial lane-dense)
    # w_ref:   (TK, 128)     merged cls+actioness weight, spatially expanded,
    #                        with the 1/(S*H*W) pooling scale folded in
    # b_ref:   (1, 128)      merged, zero-padded bias (f32)
    # out_ref: (TB, 128)     merged logits; cols [0:17]=cls, [17:19]=actioness
    # acc_ref: (TB, 128) f32 accumulator across the K grid axis
    kk = pl.program_id(1)

    @pl.when(kk == 0)
    def _init():
        acc_ref[...] = jnp.zeros_like(acc_ref)

    w = w_ref[...]
    if x_ref.dtype == jnp.float32:
        if w.dtype != jnp.float32:
            w = w.astype(jnp.float32)            # tiny (TK,128) convert
        # Segment consensus as a plain sum (mean scale lives in the weight),
        # then one lane-dense MXU dot.
        xs = jnp.sum(x_ref[...], axis=1)         # (TB, TK)
        acc_ref[...] += jnp.dot(xs, w, preferred_element_type=jnp.float32)
    else:
        # Sub-32-bit activations (e.g. bf16): route each segment through the
        # MXU natively with f32 accumulation — no whole-tile f32 upcast of x.
        part = jnp.zeros(acc_ref.shape, jnp.float32)
        for s in range(x_ref.shape[1]):
            part += jnp.dot(x_ref[:, s, :], w,
                            preferred_element_type=jnp.float32)
        acc_ref[...] += part

    @pl.when(kk == pl.num_programs(1) - 1)
    def _finalize():
        out_ref[...] = (acc_ref[...] + b_ref[...]).astype(out_ref.dtype)


# --------------------------------------------------------------------------
# One-time parameter folding (hoisted out of the per-call path).
# --------------------------------------------------------------------------
def prepare_tsp_head_params(w_cls, b_cls, w_act, b_act, *, spatial_size,
                            num_segs, weight_dtype=jnp.float32):
    """Fold {spatial mean, segment mean, both FC heads} into one lane-dense
    (C*HW, 128) weight and a (1, 128) bias.  Call once at head-build time.

    w_cls: [17, C], b_cls: [17], w_act: [2, C], b_act: [2] (PyTorch Linear)."""
    hw = int(spatial_size)
    c = w_cls.shape[1]
    k = c * hw
    w_merged = jnp.concatenate([w_cls, w_act], axis=0).astype(jnp.float32)  # [19, C]
    w_t = jnp.transpose(w_merged)                                           # [C, 19]
    scale = 1.0 / float(num_segs * hw)
    w_exp = jnp.repeat(w_t, hw, axis=0) * scale                             # [C*HW, 19]
    w_pad = jnp.zeros((k, OUT_PAD), jnp.float32).at[:, :NUM_OUT].set(w_exp)
    w_pad = w_pad.astype(weight_dtype)
    b_pad = jnp.zeros((1, OUT_PAD), jnp.float32)
    b_pad = b_pad.at[0, :NUM_CLASSES].set(b_cls.astype(jnp.float32))
    b_pad = b_pad.at[0, NUM_CLASSES:NUM_OUT].set(b_act.astype(jnp.float32))
    return w_pad, b_pad


def _choose_tk(k):
    # Single K block when small or when K is not lane-aligned; otherwise the
    # largest multiple-of-128 divisor of K that is <= TK_MAX (no ragged block).
    if k <= TK_MAX or k % 128 != 0:
        return k
    m = k // 128
    d = TK_MAX // 128
    while d > 1 and m % d != 0:
        d -= 1
    return 128 * d


# --------------------------------------------------------------------------
# Forward wrapper.
# --------------------------------------------------------------------------
def tsp_head_forward(x_nchw, num_segs, w_pad, b_pad):
    """x_nchw: [N*num_segs, C, H, W] (f32 or bf16); (w_pad, b_pad) from
    prepare_tsp_head_params().  Returns (cls_score [N,17], actioness [N,2])."""
    nt, c, h, w_sp = x_nchw.shape
    assert nt % num_segs == 0
    n = nt // num_segs
    hw = h * w_sp
    k = c * hw
    assert w_pad.shape == (k, OUT_PAD)

    # [N*S, C, H, W] -> [N, S, C*HW]: contiguous reshape (no HBM copy).
    x_k = x_nchw.reshape(n, num_segs, k)

    tk = _choose_tk(k)
    k_blocks = k // tk

    # ---- generation-aware tile sizing (HBM-bound op: maximize tile size) ----
    x_sz = jnp.dtype(x_k.dtype).itemsize
    w_sz = jnp.dtype(w_pad.dtype).itemsize
    vmem_cap = _vmem_capacity_bytes()
    cores = _num_tensorcores()
    vmem_limit = min(vmem_cap - (8 << 20), 100 << 20)
    usable = int(vmem_limit * 0.85)

    fixed = 2 * tk * OUT_PAD * w_sz + 2 * 8 * OUT_PAD * 4             # w (2-buf) + bias
    per_row = 2 * num_segs * tk * x_sz + 3 * OUT_PAD * 4              # x (2-buf) + out (2-buf) + acc
    tb = max(1, (usable - fixed) // per_row)
    tb = min(n, tb)
    if cores > 1 and n >= 16:
        # keep >= `cores` batch steps so the "parallel" axis shards (v7x/megacore)
        tb = min(tb, pl.cdiv(n, cores))
    if tb < n:
        tb = max(8, (tb // 8) * 8)        # sublane-aligned -> unmasked vst stores
        # Prefer a multiple-of-8 divisor of N so x never needs a pad copy
        # (only search down to ~half the budgeted tile).
        for cand in range(tb, max(7, tb // 2), -8):
            if n % cand == 0:
                tb = cand
                break
        if tb > n:
            tb = n

    n_blocks = pl.cdiv(n, tb)
    n_pad = n_blocks * tb
    if n_pad != n:
        # TODO(synk): rare ragged-batch path — this copies x once in HBM; a
        # masked tail block would avoid the copy at the cost of masked stores.
        x_k = jnp.pad(x_k, ((0, n_pad - n), (0, 0), (0, 0)))

    # Make sure the scoped-VMEM limit covers what we actually allocate.
    est = fixed + tb * per_row + (4 << 20)
    vmem_limit = int(min(vmem_cap, max(vmem_limit, est)))

    grid = (n_blocks, k_blocks)          # reduction (K) axis last, "arbitrary"
    out = pl.pallas_call(
        tsp_head_kernel,
        out_shape=jax.ShapeDtypeStruct((n_pad, OUT_PAD), jnp.float32),
        grid_spec=pltpu.PrefetchScalarGridSpec(
            num_scalar_prefetch=0,
            grid=grid,
            in_specs=[
                pl.BlockSpec((tb, num_segs, tk), lambda i, kk: (i, 0, kk)),
                pl.BlockSpec((tk, OUT_PAD), lambda i, kk: (kk, 0)),
                pl.BlockSpec((1, OUT_PAD), lambda i, kk: (0, 0)),
            ],
            out_specs=pl.BlockSpec((tb, OUT_PAD), lambda i, kk: (i, 0)),
            scratch_shapes=[pltpu.VMEM((tb, OUT_PAD), jnp.float32)],
        ),
        compiler_params=pltpu.CompilerParams(
            dimension_semantics=("parallel", "arbitrary"),
            vmem_limit_bytes=vmem_limit),
    )(x_k, w_pad, b_pad)

    cls_score = out[:n, :NUM_CLASSES]
    actioness_score = out[:n, NUM_CLASSES:NUM_OUT]
    return cls_score, actioness_score


# --------------------------------------------------------------------------
# Pure-JAX reference + self-test.
# --------------------------------------------------------------------------
def _reference(x_nchw, num_segs, w_cls, b_cls, w_act, b_act):
    nt, c, h, w = x_nchw.shape
    n = nt // num_segs
    feat = jnp.mean(x_nchw.astype(jnp.float32), axis=(2, 3))   # [N*S, C]
    feat = feat.reshape(n, num_segs, c).mean(axis=1)           # [N, C]
    cls = feat @ w_cls.astype(jnp.float32).T + b_cls
    act = feat @ w_act.astype(jnp.float32).T + b_act
    return cls, act


if __name__ == "__main__":
    key = jax.random.PRNGKey(0)
    k_x, k_wc, k_bc, k_wa, k_ba = jax.random.split(key, 5)

    N = 2           # batch
    NUM_SEGS = 8    # segments per clip
    C = 32          # in_channels
    H = W = 4       # spatial

    x = jax.random.normal(k_x, (N * NUM_SEGS, C, H, W), dtype=jnp.float32)
    # PyTorch Linear layout: [out, in].
    w_cls = 0.02 * jax.random.normal(k_wc, (NUM_CLASSES, C), dtype=jnp.float32)
    b_cls = 0.01 * jax.random.normal(k_bc, (NUM_CLASSES,), dtype=jnp.float32)
    w_act = 0.02 * jax.random.normal(k_wa, (NUM_ACTIONESS, C), dtype=jnp.float32)
    b_act = 0.01 * jax.random.normal(k_ba, (NUM_ACTIONESS,), dtype=jnp.float32)

    # ---- f32 activations, f32 folded weights (exact path) ----
    w_pad, b_pad = prepare_tsp_head_params(
        w_cls, b_cls, w_act, b_act,
        spatial_size=H * W, num_segs=NUM_SEGS, weight_dtype=jnp.float32)
    cls_score, actioness_score = tsp_head_forward(x, NUM_SEGS, w_pad, b_pad)
    jax.block_until_ready((cls_score, actioness_score))

    cls_ref, act_ref = _reference(x, NUM_SEGS, w_cls, b_cls, w_act, b_act)
    assert cls_score.shape == (N, NUM_CLASSES)
    assert actioness_score.shape == (N, NUM_ACTIONESS)
    assert jnp.allclose(cls_score, cls_ref, atol=1e-5, rtol=1e-4)
    assert jnp.allclose(actioness_score, act_ref, atol=1e-5, rtol=1e-4)

    # ---- bf16 activations + bf16 folded weights (MXU-native segment path) ----
    x_bf16 = x.astype(jnp.bfloat16)
    w_pad16, b_pad16 = prepare_tsp_head_params(
        w_cls, b_cls, w_act, b_act,
        spatial_size=H * W, num_segs=NUM_SEGS, weight_dtype=jnp.bfloat16)
    cls16, act16 = tsp_head_forward(x_bf16, NUM_SEGS, w_pad16, b_pad16)
    jax.block_until_ready((cls16, act16))
    cls_ref16, act_ref16 = _reference(x_bf16.astype(jnp.float32), NUM_SEGS,
                                      w_cls, b_cls, w_act, b_act)
    assert jnp.allclose(cls16, cls_ref16, atol=5e-3, rtol=5e-2)
    assert jnp.allclose(act16, act_ref16, atol=5e-3, rtol=5e-2)

    # TODO(synk): sub-head dropout omitted (identity at inference); training-mode
    # dropout would need the pltpu PRNG inside the kernel.
    print("KERNEL_OK")
</pallas_src>

<mosaic_0001>
module attributes {stable_mosaic.version = 11 : i64} {
  func.func @tsp_head_kernel(%arg0: i32, %arg1: i32, %arg2: memref<2x8x512xf32, #tpu.memory_space<vmem>>, %arg3: memref<512x128xf32, #tpu.memory_space<vmem>>, %arg4: memref<1x128xf32, #tpu.memory_space<vmem>>, %arg5: memref<2x128xf32, #tpu.memory_space<vmem>>, %arg6: memref<2x128xf32, #tpu.memory_space<vmem>>) attributes {dimension_semantics = [#tpu.dimension_semantics<parallel>, #tpu.dimension_semantics<arbitrary>], iteration_bounds = array<i64: 1, 1>, scalar_prefetch = 0 : i64, scratch_operands = 1 : i64, tpu.core_type = #tpu.core_type<tc>, window_params = [{transform_indices = @transform_0, window_bounds = array<i64: 2, 8, 512>}, {transform_indices = @transform_1, window_bounds = array<i64: 512, 128>}, {pipeline_mode = #tpu.pipeline_mode<synchronous>, transform_indices = @transform_2, window_bounds = array<i64: 1, 128>}, {transform_indices = @transform_3, window_bounds = array<i64: 2, 128>}]} {
    %c0_i32 = arith.constant 0 : i32
    %0 = arith.cmpi eq, %arg1, %c0_i32 : i32
    %1 = arith.extui %0 : i1 to i32
    %c0_i32_0 = arith.constant 0 : i32
    %2 = arith.cmpi ne, %1, %c0_i32_0 : i32
    scf.if %2 {
      %cst_12 = arith.constant 0.000000e+00 : f32
      %13 = vector.broadcast %cst_12 : f32 to vector<2x128xf32>
      %c0_13 = arith.constant 0 : index
      %c0_14 = arith.constant 0 : index
      %14 = vector.load %arg6[%c0_13, %c0_14] : memref<2x128xf32, #tpu.memory_space<vmem>>, vector<2x128xf32>
      tpu.vector_store %arg6[%c0_13, %c0_14], %13 {strides = array<i32>} : memref<2x128xf32, #tpu.memory_space<vmem>>, vector<2x128xf32>,
    } else {
    }
    %c0 = arith.constant 0 : index
    %c0_1 = arith.constant 0 : index
    %3 = vector.load %arg3[%c0, %c0_1] : memref<512x128xf32, #tpu.memory_space<vmem>>, vector<512x128xf32>
    %c0_2 = arith.constant 0 : index
    %c0_3 = arith.constant 0 : index
    %c0_4 = arith.constant 0 : index
    %4 = vector.load %arg2[%c0_2, %c0_3, %c0_4] : memref<2x8x512xf32, #tpu.memory_space<vmem>>, vector<2x8x512xf32>
    %cst = arith.constant dense<0.000000e+00> : vector<2x512xf32>
    %5 = vector.multi_reduction <add>, %4, %cst [1] : vector<2x8x512xf32> to vector<2x512xf32>
    %c0_5 = arith.constant 0 : index
    %c0_6 = arith.constant 0 : index
    %6 = vector.load %arg6[%c0_5, %c0_6] : memref<2x128xf32, #tpu.memory_space<vmem>>, vector<2x128xf32>
    %cst_7 = arith.constant dense<0.000000e+00> : vector<2x128xf32>
    %7 = tpu.matmul %5, %3, %cst_7 {dimension_numbers = #tpu.dot_dimension_numbers<[1], [0], [0], [1], [0, 0, 1, 1], [], []>} : vector<2x512xf32>, vector<512x128xf32>, vector<2x128xf32> -> vector<2x128xf32>
    %8 = arith.addf %6, %7 : vector<2x128xf32>
    %c0_8 = arith.constant 0 : index
    %c0_9 = arith.constant 0 : index
    %9 = vector.load %arg6[%c0_8, %c0_9] : memref<2x128xf32, #tpu.memory_space<vmem>>, vector<2x128xf32>
    tpu.vector_store %arg6[%c0_8, %c0_9], %8 {strides = array<i32>} : memref<2x128xf32, #tpu.memory_space<vmem>>, vector<2x128xf32>,
    %c0_i32_10 = arith.constant 0 : i32
    %10 = arith.cmpi eq, %arg1, %c0_i32_10 : i32
    %11 = arith.extui %10 : i1 to i32
    %c0_i32_11 = arith.constant 0 : i32
    %12 = arith.cmpi ne, %11, %c0_i32_11 : i32
    scf.if %12 {
      %c0_12 = arith.constant 0 : index
      %c0_13 = arith.constant 0 : index
      %13 = vector.load %arg6[%c0_12, %c0_13] : memref<2x128xf32, #tpu.memory_space<vmem>>, vector<2x128xf32>
      %c0_14 = arith.constant 0 : index
      %c0_15 = arith.constant 0 : index
      %14 = vector.load %arg4[%c0_14, %c0_15] : memref<1x128xf32, #tpu.memory_space<vmem>>, vector<1x128xf32>
      %15 = vector.broadcast %14 : vector<1x128xf32> to vector<2x128xf32>
      %16 = arith.addf %13, %15 : vector<2x128xf32>
      %c0_16 = arith.constant 0 : index
      %c0_17 = arith.constant 0 : index
      %17 = vector.load %arg5[%c0_16, %c0_17] : memref<2x128xf32, #tpu.memory_space<vmem>>, vector<2x128xf32>
      tpu.vector_store %arg5[%c0_16, %c0_17], %16 {strides = array<i32>} : memref<2x128xf32, #tpu.memory_space<vmem>>, vector<2x128xf32>,
    } else {
    }
    return
  }
  func.func @transform_0(%arg0: i32, %arg1: i32) -> (i32, i32, i32) {
    %c0_i32 = arith.constant 0 : i32
    %c0_i32_0 = arith.constant 0 : i32
    return %arg0, %c0_i32, %arg1 : i32, i32, i32
  }
  func.func @transform_1(%arg0: i32, %arg1: i32) -> (i32, i32) {
    %c0_i32 = arith.constant 0 : i32
    %c0_i32_0 = arith.constant 0 : i32
    return %arg1, %c0_i32 : i32, i32
  }
  func.func @transform_2(%arg0: i32, %arg1: i32) -> (i32, i32) {
    %c0_i32 = arith.constant 0 : i32
    %c0_i32_0 = arith.constant 0 : i32
    %c0_i32_1 = arith.constant 0 : i32
    return %c0_i32, %c0_i32_0 : i32, i32
  }
  func.func @transform_3(%arg0: i32, %arg1: i32) -> (i32, i32) {
    %c0_i32 = arith.constant 0 : i32
    %c0_i32_0 = arith.constant 0 : i32
    return %arg0, %c0_i32 : i32, i32
  }
}

</mosaic_0001>

<llo_original>
// kernel: tpu_custom_call.1
$region0: #{tpu_custom_call.1}
  #allocation0 [shape = 'u32[]', space=smem, size = 0x4, offset = 0x4, fixed_abs, tag = 'smem constant byte address 0x4 - core index']
  #allocation1 [shape = 'u32[72,128]{1,0:T(1,128)}', space=vmem, size = 0x9000, scoped, tag = 'internal scratch']
  #allocation2 [shape = 'f32[2,128]{1,0:T(2,128)}', space=vmem, size = 0x400, scoped, tag = 'scratch operand']
  %s0 = inlined_call_operand.hbm [shape: f32[2,8,512], index: 0, kind: input, shape index: {}]
  %s1 = inlined_call_operand.hbm [shape: f32[512,128], index: 1, kind: input, shape index: {}]
  %s2 = inlined_call_operand.vmem [shape: f32[1,128], index: 2, kind: input, shape index: {}]
  %s3 = inlined_call_operand.hbm [shape: f32[2,128], index: 3, kind: output, shape index: {}]
  %s4 = sld [smem:[#allocation0]]
  $region38: #{tpu_custom_call.1} parent=0
    _
  %s6 = ssub.s32 1, %s4
  %s7 = scalar_select 0, %s6, %s4
  $region1: #{tpu_custom_call.1} parent=0
    #allocation3 [shape = 'u8[32768]{0}', space=vmem, size = 0x8000, scoped, tag = 'input window, operand 0, single buffered']
    #allocation4 [shape = 's32[1]{0}', space=sflag, size = 0x4, scoped, tag = 'scoped memory for tpu_custom_call.1']
    #allocation5 [shape = 's32[1]{0}', space=sflag, size = 0x4, scoped, tag = 'scoped memory for tpu_custom_call.1']
    #allocation6 [shape = 'u8[262144]{0}', space=vmem, size = 0x40000, scoped, tag = 'input window, operand 1, single buffered']
    #allocation7 [shape = 's32[1]{0}', space=sflag, size = 0x4, scoped, tag = 'scoped memory for tpu_custom_call.1']
    #allocation8 [shape = 'u8[1024]{0}', space=vmem, size = 0x400, scoped, tag = 'output window, operand 0, single buffered']
    %8 = vsyncpa [#allocation4], 0
    %9 = vsyncpa [#allocation7], 0
    %10 = vsyncpa [#allocation5], 0
    // Predicated region
    $region2: #{tpu_custom_call.1} parent=1 // pred_check
      _
    $region3: #{tpu_custom_call.1} parent=1 // pred_check_branch
      %12 = sbr.rel (0) target = $region5
    $region4: #{tpu_custom_call.1} parent=1 // pred_region
      %14 = vsyncadd [#allocation4], 0
      %s15 = sshll.u32 %s0, 4
      %s16 = int_to_ptr.hbm [resolvable:$true] %s15
      %s17 = sshll.u32 [#allocation3], 4
      %s18 = int_to_ptr.vmem [resolvable:$true] %s17
      %23 = dma.hbm_to_vmem [thread:$0]  %s16, 1024, %s18, [#allocation4], 512, 512, 32
    $region5: #{tpu_custom_call.1} parent=1 // pred_fallthru
      _
    // Predicated region
    $region6: #{tpu_custom_call.1} parent=1 // pred_check
      _
    $region7: #{tpu_custom_call.1} parent=1 // pred_check_branch
      %25 = sbr.rel (0) target = $region9
    $region8: #{tpu_custom_call.1} parent=1 // pred_region
      %27 = vsyncadd [#allocation7], 0
      %s28 = sshll.u32 %s1, 4
      %s29 = int_to_ptr.hbm [resolvable:$true] %s28
      %s30 = sshll.u32 [#allocation6], 4
      %s31 = int_to_ptr.vmem [resolvable:$true] %s30
      %36 = dma.hbm_to_vmem [thread:$0]  %s29, 8192, %s31, [#allocation7], 128, 128, 8
    $region9: #{tpu_custom_call.1} parent=1 // pred_fallthru
      _
    // Predicated region
    $region10: #{tpu_custom_call.1} parent=1 // pred_check
      _
    $region11: #{tpu_custom_call.1} parent=1 // pred_check_branch
      %38 = sbr.rel (0) target = $region13
    $region12: #{tpu_custom_call.1} parent=1 // pred_region
      _
    $region13: #{tpu_custom_call.1} parent=1 // pred_fallthru
      _
    // Predicated region
    $region14: #{tpu_custom_call.1} parent=1 // pred_check
      _
    $region15: #{tpu_custom_call.1} parent=1 // pred_check_branch
      %40 = sbr.rel (0) target = $region17
    $region16: #{tpu_custom_call.1} parent=1 // pred_region
      %42 = dma.done [#allocation4], 1024
    $region17: #{tpu_custom_call.1} parent=1 // pred_fallthru
      _
    // Predicated region
    $region18: #{tpu_custom_call.1} parent=1 // pred_check
      _
    $region19: #{tpu_custom_call.1} parent=1 // pred_check_branch
      %44 = sbr.rel (0) target = $region21
    $region20: #{tpu_custom_call.1} parent=1 // pred_region
      %46 = dma.done [#allocation7], 8192
    $region21: #{tpu_custom_call.1} parent=1 // pred_fallthru
      _
    %p47 = scmp.eq.s32.totalorder 0, 0
    // Predicated region
    $region22: #{tpu_custom_call.1} parent=1 // pred_check
      %p48 = pneg %p47
    $region23: #{tpu_custom_call.1} parent=1 // pred_check_branch
      %50 = sbr.rel (%p48) target = $region25
    $region24: #{tpu_custom_call.1} parent=1 // pred_region
      %51 = vst [vmem:[#allocation2] sm:$0x3] 0.0
    $region25: #{tpu_custom_call.1} parent=1 // pred_fallthru
      _
    %v52 = vld [vmem:[#allocation6] sm:$0xff]
    %v53 = vld [vmem:[#allocation6 + $0x8] sm:$0xff]
    %v54 = vld [vmem:[#allocation6 + $0x10] sm:$0xff]
    %v55 = vld [vmem:[#allocation6 + $0x18] sm:$0xff]
    %v56 = vld [vmem:[#allocation6 + $0x20] sm:$0xff]
    %v57 = vld [vmem:[#allocation6 + $0x28] sm:$0xff]
    %v58 = vld [vmem:[#allocation6 + $0x30] sm:$0xff]
    %v59 = vld [vmem:[#allocation6 + $0x38] sm:$0xff]
    %v60 = vld [vmem:[#allocation6 + $0x40] sm:$0xff]
    %v61 = vld [vmem:[#allocation6 + $0x48] sm:$0xff]
    %v62 = vld [vmem:[#allocation6 + $0x50] sm:$0xff]
    %v63 = vld [vmem:[#allocation6 + $0x58] sm:$0xff]
    %v64 = vld [vmem:[#allocation6 + $0x60] sm:$0xff]
    %v65 = vld [vmem:[#allocation6 + $0x68] sm:$0xff]
    %v66 = vld [vmem:[#allocation6 + $0x70] sm:$0xff]
    %v67 = vld [vmem:[#allocation6 + $0x78] sm:$0xff]
    %v68 = vld [vmem:[#allocation6 + $0x80] sm:$0xff]
    %v69 = vld [vmem:[#allocation6 + $0x88] sm:$0xff]
    %v70 = vld [vmem:[#allocation6 + $0x90] sm:$0xff]
    %v71 = vld [vmem:[#allocation6 + $0x98] sm:$0xff]
    %v72 = vld [vmem:[#allocation6 + $0xa0] sm:$0xff]
    %v73 = vld [vmem:[#allocation6 + $0xa8] sm:$0xff]
    %v74 = vld [vmem:[#allocation6 + $0xb0] sm:$0xff]
    %v75 = vld [vmem:[#allocation6 + $0xb8] sm:$0xff]
    %v76 = vld [vmem:[#allocation6 + $0xc0] sm:$0xff]
    %v77 = vld [vmem:[#allocation6 + $0xc8] sm:$0xff]
    %v78 = vld [vmem:[#allocation6 + $0xd0] sm:$0xff]
    %v79 = vld [vmem:[#allocation6 + $0xd8] sm:$0xff]
    %v80 = vld [vmem:[#allocation6 + $0xe0] sm:$0xff]
    %v81 = vld [vmem:[#allocation6 + $0xe8] sm:$0xff]
    %v82 = vld [vmem:[#allocation6 + $0xf0] sm:$0xff]
    %v83 = vld [vmem:[#allocation6 + $0xf8] sm:$0xff]
    %v84 = vld [vmem:[#allocation6 + $0x100] sm:$0xff]
    %v85 = vld [vmem:[#allocation6 + $0x108] sm:$0xff]
    %v86 = vld [vmem:[#allocation6 + $0x110] sm:$0xff]
    %v87 = vld [vmem:[#allocation6 + $0x118] sm:$0xff]
    %v88 = vld [vmem:[#allocation6 + $0x120] sm:$0xff]
    %v89 = vld [vmem:[#allocation6 + $0x128] sm:$0xff]
    %v90 = vld [vmem:[#allocation6 + $0x130] sm:$0xff]
    %v91 = vld [vmem:[#allocation6 + $0x138] sm:$0xff]
    %v92 = vld [vmem:[#allocation6 + $0x140] sm:$0xff]
    %v93 = vld [vmem:[#allocation6 + $0x148] sm:$0xff]
    %v94 = vld [vmem:[#allocation6 + $0x150] sm:$0xff]
    %v95 = vld [vmem:[#allocation6 + $0x158] sm:$0xff]
    %v96 = vld [vmem:[#allocation6 + $0x160] sm:$0xff]
    %v97 = vld [vmem:[#allocation6 + $0x168] sm:$0xff]
    %v98 = vld [vmem:[#allocation6 + $0x170] sm:$0xff]
    %v99 = vld [vmem:[#allocation6 + $0x178] sm:$0xff]
    %v100 = vld [vmem:[#allocation6 + $0x180] sm:$0xff]
    %v101 = vld [vmem:[#allocation6 + $0x188] sm:$0xff]
    %v102 = vld [vmem:[#allocation6 + $0x190] sm:$0xff]
    %v103 = vld [vmem:[#allocation6 + $0x198] sm:$0xff]
    %v104 = vld [vmem:[#allocation6 + $0x1a0] sm:$0xff]
    %v105 = vld [vmem:[#allocation6 + $0x1a8] sm:$0xff]
    %v106 = vld [vmem:[#allocation6 + $0x1b0] sm:$0xff]
    %v107 = vld [vmem:[#allocation6 + $0x1b8] sm:$0xff]
    %v108 = vld [vmem:[#allocation6 + $0x1c0] sm:$0xff]
    %v109 = vld [vmem:[#allocation6 + $0x1c8] sm:$0xff]
    %v110 = vld [vmem:[#allocation6 + $0x1d0] sm:$0xff]
    %v111 = vld [vmem:[#allocation6 + $0x1d8] sm:$0xff]
    %v112 = vld [vmem:[#allocation6 + $0x1e0] sm:$0xff]
    %v113 = vld [vmem:[#allocation6 + $0x1e8] sm:$0xff]
    %v114 = vld [vmem:[#allocation6 + $0x1f0] sm:$0xff]
    %v115 = vld [vmem:[#allocation6 + $0x1f8] sm:$0xff]
    %v116 = vld [vmem:[#allocation3] sm:$0xff]
    %v117 = vld [vmem:[#allocation3 + $0x8] sm:$0xff]
    %v118 = vld [vmem:[#allocation3 + $0x10] sm:$0xff]
    %v119 = vld [vmem:[#allocation3 + $0x18] sm:$0xff]
    %v120 = vld [vmem:[#allocation3 + $0x20] sm:$0xff]
    %v121 = vld [vmem:[#allocation3 + $0x28] sm:$0xff]
    %v122 = vld [vmem:[#allocation3 + $0x30] sm:$0xff]
    %v123 = vld [vmem:[#allocation3 + $0x38] sm:$0xff]
    %v124 = vrot.slane %v116, 4
    %v125 = vadd.f32 %v116, %v124
    %v126 = vrot.slane %v125, 2
    %v127 = vadd.f32 %v125, %v126
    %v128 = vrot.slane %v127, 1
    %v129 = vadd.f32 %v127, %v128
    %v130 = vrot.slane %v117, 4
    %v131 = vadd.f32 %v117, %v130
    %v132 = vrot.slane %v131, 2
    %v133 = vadd.f32 %v131, %v132
    %v134 = vrot.slane %v133, 1
    %v135 = vadd.f32 %v133, %v134
    %v136 = vrot.slane %v118, 4
    %v137 = vadd.f32 %v118, %v136
    %v138 = vrot.slane %v137, 2
    %v139 = vadd.f32 %v137, %v138
    %v140 = vrot.slane %v139, 1
    %v141 = vadd.f32 %v139, %v140
    %v142 = vrot.slane %v119, 4
    %v143 = vadd.f32 %v119, %v142
    %v144 = vrot.slane %v143, 2
    %v145 = vadd.f32 %v143, %v144
    %v146 = vrot.slane %v145, 1
    %v147 = vadd.f32 %v145, %v146
    %v148 = vrot.slane %v120, 4
    %v149 = vadd.f32 %v120, %v148
    %v150 = vrot.slane %v149, 2
    %v151 = vadd.f32 %v149, %v150
    %v152 = vrot.slane %v151, 1
    %v153 = vadd.f32 %v151, %v152
    %v154 = vrot.slane %v121, 4
    %v155 = vadd.f32 %v121, %v154
    %v156 = vrot.slane %v155, 2
    %v157 = vadd.f32 %v155, %v156
    %v158 = vrot.slane %v157, 1
    %v159 = vadd.f32 %v157, %v158
    %v160 = vrot.slane %v122, 4
    %v161 = vadd.f32 %v122, %v160
    %v162 = vrot.slane %v161, 2
    %v163 = vadd.f32 %v161, %v162
    %v164 = vrot.slane %v163, 1
    %v165 = vadd.f32 %v163, %v164
    %v166 = vrot.slane %v123, 4
    %v167 = vadd.f32 %v123, %v166
    %v168 = vrot.slane %v167, 2
    %v169 = vadd.f32 %v167, %v168
    %v170 = vrot.slane %v169, 1
    %v171 = vadd.f32 %v169, %v170
    %v172 = vld [vmem:[#allocation2] sm:$0x3]
    %vm181 = vcmask 1041409
    %v182 = vsel %vm181, %v153, %v129
    %v183 = vsel %vm181, %v159, %v135
    %v184 = vsel %vm181, %v165, %v141
    %v185 = vsel %vm181, %v171, %v147
    %190 = vmatpush.msra.mxu0 %v67
    %191 = vmatpush.msra.mxu0 %v66
    %192 = vmatpush.msra.mxu0 %v65
    %193 = vmatpush.msra.mxu0 %v64
    %194 = vmatpush.msra.mxu0 %v63
    %195 = vmatpush.msra.mxu0 %v62
    %196 = vmatpush.msra.mxu0 %v61
    %197 = vmatpush.msra.mxu0 %v60
    %198 = vmatpush.msra.mxu0 %v59
    %199 = vmatpush.msra.mxu0 %v58
    %200 = vmatpush.msra.mxu0 %v57
    %201 = vmatpush.msra.mxu0 %v56
    %202 = vmatpush.msra.mxu0 %v55
    %203 = vmatpush.msra.mxu0 %v54
    %204 = vmatpush.msra.mxu0 %v53
    %205 = vmatpush.msra.mxu0 %v52
    %206 = vmatmul.f32.gmra.mxu0 %v182
    %v207 = vpop.f32.mrf.mxu0
    %v208 = vadd.f32 0.0, %v207
    %209 = vdwg.mxu0
    %210 = vmatpush.msra.mxu0 %v83
    %211 = vmatpush.msra.mxu0 %v82
    %212 = vmatpush.msra.mxu0 %v81
    %213 = vmatpush.msra.mxu0 %v80
    %214 = vmatpush.msra.mxu0 %v79
    %215 = vmatpush.msra.mxu0 %v78
    %216 = vmatpush.msra.mxu0 %v77
    %217 = vmatpush.msra.mxu0 %v76
    %218 = vmatpush.msra.mxu0 %v75
    %219 = vmatpush.msra.mxu0 %v74
    %220 = vmatpush.msra.mxu0 %v73
    %221 = vmatpush.msra.mxu0 %v72
    %222 = vmatpush.msra.mxu0 %v71
    %223 = vmatpush.msra.mxu0 %v70
    %224 = vmatpush.msra.mxu0 %v69
    %225 = vmatpush.msra.mxu0 %v68
    %226 = vmatmul.f32.gmra.mxu0 %v183
    %v227 = vpop.f32.mrf.mxu0
    %v228 = vadd.f32 %v208, %v227
    %229 = vdwg.mxu0
    %230 = vmatpush.msra.mxu0 %v99
    %231 = vmatpush.msra.mxu0 %v98
    %232 = vmatpush.msra.mxu0 %v97
    %233 = vmatpush.msra.mxu0 %v96
    %234 = vmatpush.msra.mxu0 %v95
    %235 = vmatpush.msra.mxu0 %v94
    %236 = vmatpush.msra.mxu0 %v93
    %237 = vmatpush.msra.mxu0 %v92
    %238 = vmatpush.msra.mxu0 %v91
    %239 = vmatpush.msra.mxu0 %v90
    %240 = vmatpush.msra.mxu0 %v89
    %241 = vmatpush.msra.mxu0 %v88
    %242 = vmatpush.msra.mxu0 %v87
    %243 = vmatpush.msra.mxu0 %v86
    %244 = vmatpush.msra.mxu0 %v85
    %245 = vmatpush.msra.mxu0 %v84
    %246 = vmatmul.f32.gmra.mxu0 %v184
    %v247 = vpop.f32.mrf.mxu0
    %v248 = vadd.f32 %v228, %v247
    %249 = vdwg.mxu0
    %250 = vmatpush.msra.mxu0 %v115
    %251 = vmatpush.msra.mxu0 %v114
    %252 = vmatpush.msra.mxu0 %v113
    %253 = vmatpush.msra.mxu0 %v112
    %254 = vmatpush.msra.mxu0 %v111
    %255 = vmatpush.msra.mxu0 %v110
    %256 = vmatpush.msra.mxu0 %v109
    %257 = vmatpush.msra.mxu0 %v108
    %258 = vmatpush.msra.mxu0 %v107
    %259 = vmatpush.msra.mxu0 %v106
    %260 = vmatpush.msra.mxu0 %v105
    %261 = vmatpush.msra.mxu0 %v104
    %262 = vmatpush.msra.mxu0 %v103
    %263 = vmatpush.msra.mxu0 %v102
    %264 = vmatpush.msra.mxu0 %v101
    %265 = vmatpush.msra.mxu0 %v100
    %266 = vmatmul.f32.gmra.mxu0 %v185
    %v267 = vpop.f32.mrf.mxu0
    %v268 = vadd.f32 %v248, %v267
    %269 = vdwg.mxu0
    %v270 = vadd.f32 %v172, %v268
    %271 = vst [vmem:[#allocation2] sm:$0x3] %v270
    // Predicated region
    $region26: #{tpu_custom_call.1} parent=1 // pred_check
      %p272 = pneg %p47
    $region27: #{tpu_custom_call.1} parent=1 // pred_check_branch
      %274 = sbr.rel (%p272) target = $region29
    $region28: #{tpu_custom_call.1} parent=1 // pred_region
      %v275 = vld [vmem:[#allocation2] sm:$0x3]
      %v276 = vld [vmem:[%s2] sm:$0x1]
      %v278 = vperm.slane %v276, 0
      %v280 = vadd.f32 %v275, %v278
      %281 = vst [vmem:[#allocation8] sm:$0x3] %v280
    $region29: #{tpu_custom_call.1} parent=1 // pred_fallthru
      _
    // Predicated region
    $region30: #{tpu_custom_call.1} parent=1 // pred_check
      _
    $region31: #{tpu_custom_call.1} parent=1 // pred_check_branch
      %283 = sbr.rel (0) target = $region33
    $region32: #{tpu_custom_call.1} parent=1 // pred_region
      %285 = vsyncadd [#allocation5], 0
      %s287 = sshll.u32 [#allocation8], 4
      %s288 = int_to_ptr.vmem [resolvable:$true] %s287
      %s289 = sshll.u32 %s3, 4
      %s290 = int_to_ptr.hbm [resolvable:$true] %s289
      %292 = dma.vmem_to_hbm [thread:$0]  %s288, 32, %s290, [#allocation5]
    $region33: #{tpu_custom_call.1} parent=1 // pred_fallthru
      _
    // Predicated region
    $region34: #{tpu_custom_call.1} parent=1 // pred_check
      _
    $region35: #{tpu_custom_call.1} parent=1 // pred_check_branch
      %294 = sbr.rel (0) target = $region37
    $region36: #{tpu_custom_call.1} parent=1 // pred_region
      %296 = dma.done [#allocation5], 32
    $region37: #{tpu_custom_call.1} parent=1 // pred_fallthru
      _
    %297 = vsyncpa [#allocation4], 1
    %298 = vsyncpa [#allocation7], 1
    %299 = vsyncpa [#allocation5], 1

</llo_original>
